<compile_context>
chip_gen: v6e
topology: v6e:2x2x1
jax: 0.10.0
libtpu: 0.0.40
codegen_flags: <defaults>
</compile_context>

<pallas_src>
import math

import jax
import jax.numpy as jnp
from jax.experimental import pallas as pl
from jax.experimental.pallas import tpu as pltpu

_LANE = 128
_TARGET_TILE_BYTES = 2 << 20  # 2 MiB tiles: amortizes ~0.35us/step, fits all gens


def _copy_kernel(x_ref, o_ref):
    # Identity copy of one (block_rows, cols) tile.
    o_ref[...] = x_ref[...]


def _min_sublanes(dtype):
    """Sublane multiple required for this dtype (f32:8, bf16:16, int8/fp8:32)."""
    itemsize = jnp.dtype(dtype).itemsize
    return max(8, 32 // max(itemsize, 1))


def _pick_layout(total, dtype):
    """Pick (rows, cols, block_rows) for a lane-dense tiled copy, or None."""
    if total % _LANE != 0:
        return None
    itemsize = jnp.dtype(dtype).itemsize
    min_sub = _min_sublanes(dtype)

    # Widen the lane dimension: largest multiple of 128 dividing `total`.
    cols = _LANE
    for c in (8192, 4096, 2048, 1024, 512, 256):
        if total % c == 0 and (total // c) % min_sub == 0:
            cols = c
            break
    rows = total // cols
    if rows % min_sub != 0:
        # Fall back to the narrowest lane-dense layout.
        cols = _LANE
        rows = total // cols
        if rows % min_sub != 0:
            return None

    # Largest sublane-aligned block_rows with tile size <= _TARGET_TILE_BYTES.
    max_block_rows = max(
        min_sub, (_TARGET_TILE_BYTES // (cols * itemsize)) // min_sub * min_sub
    )
    block_rows = min(rows, max_block_rows)
    # Shrink to an exact divisor of rows (keeps every tile full -> unmasked DMA).
    while block_rows > min_sub and rows % block_rows != 0:
        block_rows -= min_sub
    if rows % block_rows != 0:
        return None

    # For non-trivial inputs keep the grid >= 2 so v7x can shard across its
    # two TensorCores (no-op on v5e/v6e).
    if rows // block_rows == 1 and rows * cols * itemsize > (1 << 20):
        half = (rows // 2) // min_sub * min_sub
        if half >= min_sub and rows % half == 0:
            block_rows = half

    return rows, cols, block_rows


def _pallas_copy_2d(x2d, block_rows):
    """Tiled identity copy of a (R, C) array through VMEM."""
    R, C = x2d.shape
    itemsize = jnp.dtype(x2d.dtype).itemsize
    grid = (R // block_rows,)
    return pl.pallas_call(
        _copy_kernel,
        out_shape=jax.ShapeDtypeStruct((R, C), x2d.dtype),
        grid_spec=pltpu.PrefetchScalarGridSpec(
            num_scalar_prefetch=0,
            grid=grid,
            in_specs=[pl.BlockSpec((block_rows, C), lambda i: (i, 0))],
            out_specs=pl.BlockSpec((block_rows, C), lambda i: (i, 0)),
        ),
        compiler_params=pltpu.CompilerParams(
            dimension_semantics=("parallel",),
        ),
        cost_estimate=pl.CostEstimate(
            flops=0, transcendentals=0, bytes_accessed=2 * R * C * itemsize
        ),
    )(x2d)


def view_forward(x, dim, shape, *, materialize=False):
    """JAX equivalent of View(dim, shape).forward(x).

    Default path is a metadata-only reshape (same as torch .view()).  With
    materialize=True, the element-order-preserving copy is executed inside an
    optimized Pallas TPU kernel and then reinterpreted to the new shape.
    """
    in_shape = list(x.shape)
    new_shape = in_shape[:dim] + list(shape) + in_shape[dim + 1:]

    # Shape validation (PyTorch .view raises on element-count mismatch).
    if -1 not in new_shape:
        if math.prod(new_shape) != x.size:
            raise ValueError(
                f"view: cannot reshape array of size {x.size} into {new_shape}"
            )

    if not materialize:
        # A view is pure metadata; XLA reshape of a contiguous buffer is free.
        return x.reshape(new_shape)

    layout = _pick_layout(x.size, x.dtype)
    if layout is None:
        # Shapes the tiler can't cover cleanly: still correct, just no kernel.
        return x.reshape(new_shape)

    rows, cols, block_rows = layout
    x2d = x.reshape(rows, cols)  # row-major flatten: identical element order
    y2d = _pallas_copy_2d(x2d, block_rows)
    return y2d.reshape(new_shape)


if __name__ == "__main__":
    key = jax.random.PRNGKey(0)
    x = jax.random.normal(key, (2, 4, 16, 16), dtype=jnp.float32)

    dim = 1
    shape = (2, 2)  # 4 -> (2, 2); (2, 4, 16, 16) -> (2, 2, 2, 16, 16)

    # Recommended (metadata-only) path.
    y_view = view_forward(x, dim, shape)
    jax.block_until_ready(y_view)

    # Materialized path: runs the Pallas identity-copy kernel once.
    y_copy = view_forward(x, dim, shape, materialize=True)
    jax.block_until_ready(y_copy)

    expected = x.reshape((2, 2, 2, 16, 16))
    assert y_view.shape == (2, 2, 2, 16, 16), y_view.shape
    assert y_copy.shape == (2, 2, 2, 16, 16), y_copy.shape
    assert jnp.array_equal(y_view, expected)
    assert jnp.array_equal(y_copy, expected)

    print("KERNEL_OK")
</pallas_src>

<mosaic_0001>
module attributes {stable_mosaic.version = 11 : i64} {
  func.func @_copy_kernel(%arg0: i32, %arg1: memref<8x256xf32, #tpu.memory_space<vmem>>, %arg2: memref<8x256xf32, #tpu.memory_space<vmem>>) attributes {dimension_semantics = [#tpu.dimension_semantics<parallel>], iteration_bounds = array<i64: 1>, scalar_prefetch = 0 : i64, scratch_operands = 0 : i64, tpu.core_type = #tpu.core_type<tc>, window_params = [{transform_indices = @transform_0, window_bounds = array<i64: 8, 256>}, {transform_indices = @transform_1, window_bounds = array<i64: 8, 256>}]} {
    %c0 = arith.constant 0 : index
    %c0_0 = arith.constant 0 : index
    %0 = vector.load %arg1[%c0, %c0_0] : memref<8x256xf32, #tpu.memory_space<vmem>>, vector<8x256xf32>
    %c0_1 = arith.constant 0 : index
    %c0_2 = arith.constant 0 : index
    %1 = vector.load %arg2[%c0_1, %c0_2] : memref<8x256xf32, #tpu.memory_space<vmem>>, vector<8x256xf32>
    tpu.vector_store %arg2[%c0_1, %c0_2], %0 {strides = array<i32>} : memref<8x256xf32, #tpu.memory_space<vmem>>, vector<8x256xf32>,
    return
  }
  func.func @transform_0(%arg0: i32) -> (i32, i32) {
    %c0_i32 = arith.constant 0 : i32
    %c0_i32_0 = arith.constant 0 : i32
    return %arg0, %c0_i32 : i32, i32
  }
  func.func @transform_1(%arg0: i32) -> (i32, i32) {
    %c0_i32 = arith.constant 0 : i32
    %c0_i32_0 = arith.constant 0 : i32
    return %arg0, %c0_i32 : i32, i32
  }
}

</mosaic_0001>

<llo_original>
// kernel: tpu_custom_call.1
$region0: #{tpu_custom_call.1}
  #allocation0 [shape = 'u32[]', space=smem, size = 0x4, offset = 0x4, fixed_abs, tag = 'smem constant byte address 0x4 - core index']
  #allocation1 [shape = 'u32[144,128]{1,0:T(1,128)}', space=vmem, size = 0x12000, scoped, tag = 'internal scratch']
  %s0 = inlined_call_operand.hbm [shape: f32[8,256], index: 0, kind: input, shape index: {}]
  %s1 = inlined_call_operand.hbm [shape: f32[8,256], index: 1, kind: output, shape index: {}]
  %s2 = sld [smem:[#allocation0]]
  $region18: #{tpu_custom_call.1} parent=0
    _
  %s4 = ssub.s32 1, %s2
  %s5 = scalar_select 0, %s4, %s2
  $region1: #{tpu_custom_call.1} parent=0
    #allocation2 [shape = 'u8[8192]{0}', space=vmem, size = 0x2000, scoped, tag = 'input window, operand 0, single buffered']
    #allocation3 [shape = 's32[1]{0}', space=sflag, size = 0x4, scoped, tag = 'scoped memory for tpu_custom_call.1']
    #allocation4 [shape = 's32[1]{0}', space=sflag, size = 0x4, scoped, tag = 'scoped memory for tpu_custom_call.1']
    #allocation5 [shape = 'u8[8192]{0}', space=vmem, size = 0x2000, scoped, tag = 'output window, operand 0, single buffered']
    %6 = vsyncpa [#allocation3], 0
    %7 = vsyncpa [#allocation4], 0
    // Predicated region
    $region2: #{tpu_custom_call.1} parent=1 // pred_check
      _
    $region3: #{tpu_custom_call.1} parent=1 // pred_check_branch
      %9 = sbr.rel (0) target = $region5
    $region4: #{tpu_custom_call.1} parent=1 // pred_region
      %s11 = ssub.s32 256, 256
      %12 = vsyncadd [#allocation3], %s11
      %s14 = sshll.u32 [#allocation2], 4
      %s15 = int_to_ptr.vmem [resolvable:$true] %s14
      %17 = dma.hbm_to_vmem [thread:$0]  %s0, 256, %s15, [#allocation3]
    $region5: #{tpu_custom_call.1} parent=1 // pred_fallthru
      _
    // Predicated region
    $region6: #{tpu_custom_call.1} parent=1 // pred_check
      _
    $region7: #{tpu_custom_call.1} parent=1 // pred_check_branch
      %19 = sbr.rel (0) target = $region9
    $region8: #{tpu_custom_call.1} parent=1 // pred_region
      %20 = dma.done [#allocation3], 256
    $region9: #{tpu_custom_call.1} parent=1 // pred_fallthru
      _
    %v21 = vld [vmem:[#allocation2] sm:$0xff]
    %v22 = vld [vmem:[#allocation2 + $0x8] sm:$0xff]
    %23 = vst [vmem:[#allocation5] sm:$0xff] %v21
    %24 = vst [vmem:[#allocation5 + $0x8] sm:$0xff] %v22
    // Predicated region
    $region10: #{tpu_custom_call.1} parent=1 // pred_check
      _
    $region11: #{tpu_custom_call.1} parent=1 // pred_check_branch
      %26 = sbr.rel (0) target = $region13
    $region12: #{tpu_custom_call.1} parent=1 // pred_region
      %s28 = ssub.s32 256, 256
      %29 = vsyncadd [#allocation4], %s28
      %s31 = sshll.u32 [#allocation5], 4
      %s32 = int_to_ptr.vmem [resolvable:$true] %s31
      %34 = dma.vmem_to_hbm [thread:$0]  %s32, 256, %s1, [#allocation4]
    $region13: #{tpu_custom_call.1} parent=1 // pred_fallthru
      _
    // Predicated region
    $region14: #{tpu_custom_call.1} parent=1 // pred_check
      _
    $region15: #{tpu_custom_call.1} parent=1 // pred_check_branch
      %36 = sbr.rel (0) target = $region17
    $region16: #{tpu_custom_call.1} parent=1 // pred_region
      %37 = dma.done [#allocation4], 256
    $region17: #{tpu_custom_call.1} parent=1 // pred_fallthru
      _
    %38 = vsyncpa [#allocation3], 1
    %39 = vsyncpa [#allocation4], 1

</llo_original>
